<compile_context>
chip_gen: v5e
topology: v5e:2x2
jax: 0.10.0
libtpu: 0.0.40
codegen_flags: <defaults>
</compile_context>

<pallas_src>
import functools
import math

import jax
import jax.numpy as jnp
from jax.experimental import pallas as pl
from jax.experimental.pallas import tpu as pltpu


def _round_up(n, m):
    return (n + m - 1) // m * m


def _value_kernel(xt_ref, w1t_ref, b1t_ref, w2t_ref, b2t_ref, w3t_ref, b3_ref,
                  o_ref, *, n_chunks, cs):
    # xt : (D, TB)   input (batch in lanes), f32
    # w1t: (H1, D)   mxu dtype (bf16 by default)
    # b1t: (H1, 1)   f32
    # w2t: (H2, H1)  mxu dtype
    # b2t: (H2, 1)   f32
    # w3t: (H2, 1)   f32 (value-head row as a column)
    # b3 : (1, 1)    f32
    # out: (1, TB)   f32, lane-major
    w1t = w1t_ref[...]
    w2t = w2t_ref[...]
    b1t = b1t_ref[...]
    b2t = b2t_ref[...]
    w3t = w3t_ref[...]
    b3 = b3_ref[...]
    mxu_dtype = w1t.dtype

    # Statically unrolled chunk loop: chunks are independent, so the LLO
    # scheduler can overlap EUP tanh of chunk c with MXU pushes of chunk c+1.
    for c in range(n_chunks):
        lo = c * cs  # static, lane-aligned (cs is a multiple of 128)
        xt = xt_ref[:, lo:lo + cs].astype(mxu_dtype)               # (D, cs)
        h1 = jnp.tanh(
            jnp.dot(w1t, xt, preferred_element_type=jnp.float32) + b1t)
        h2 = jnp.tanh(
            jnp.dot(w2t, h1.astype(mxu_dtype),
                    preferred_element_type=jnp.float32) + b2t)
        # Value head (out_dim == 1): VPU multiply + sublane (XLU) reduce
        # -> (1, cs), already lane-major, so the store is lane-dense.
        v = jnp.sum(h2 * w3t, axis=0, keepdims=True) + b3
        o_ref[:, lo:lo + cs] = v.astype(o_ref.dtype)


def value_forward(x, params, *, max_batch_tile=1024, mxu_dtype=jnp.bfloat16):
    """Fused Value-MLP forward.

    x: (B, state_dim) float32
    params: w1 (D,H1), b1 (1,H1), w2 (H1,H2), b2 (1,H2),
            w3 (1,H2)  [PyTorch value_head.weight layout], b3 (1,1).
    Returns (B, 1) float32.
    """
    w1, b1 = params["w1"], params["b1"]
    w2, b2 = params["w2"], params["b2"]
    w3, b3 = params["w3"], params["b3"]

    B, D = x.shape
    H1 = w1.shape[1]
    H2 = w2.shape[1]
    assert w3.shape == (1, H2) and b3.shape == (1, 1)

    # Batch tile: multiple of 128 (lane-dense, MXU-friendly N), capped at
    # max_batch_tile, and chosen so there are >= 2 grid steps whenever
    # B > 128 (keeps both v7x TensorCores busy via the "parallel" axis).
    if B > 128:
        tb = min(max_batch_tile, _round_up(pl.cdiv(B, 2), 128))
    else:
        tb = 128
    b_pad = _round_up(B, tb)
    g = b_pad // tb

    # Sub-chunking inside the tile: keep chunks >= 256 lanes (full MXU width).
    n_chunks = max(1, min(4, tb // 256))
    cs = tb // n_chunks
    assert cs % 128 == 0

    # Transposed (and, if needed, padded) input: (D, b_pad), batch in lanes.
    # One small XLA relayout over a (D, B) array; D == state_dim is tiny.
    xt = x.T
    if b_pad != B:
        xt = jnp.pad(xt, ((0, 0), (0, b_pad - B)))

    # One-time wrapper-side relayout / cast of parameters (all tiny).
    w1t = w1.T.astype(mxu_dtype)            # (H1, D)  MXU operand
    w2t = w2.T.astype(mxu_dtype)            # (H2, H1) MXU operand
    b1t = b1.reshape(H1, 1)                 # f32
    b2t = b2.reshape(H2, 1)                 # f32
    w3t = w3.reshape(H2, 1)                 # f32 (head stays on the VPU)

    const2 = lambda i: (0, 0)  # weights/biases: same block every grid step

    flops = 2 * b_pad * (D * H1 + H1 * H2 + H2)
    transcendentals = b_pad * (H1 + H2)
    bytes_accessed = int(
        xt.size * xt.dtype.itemsize
        + b_pad * 4
        + sum(int(a.size) * a.dtype.itemsize
              for a in (w1t, b1t, w2t, b2t, w3t, b3))
    )

    kernel = functools.partial(_value_kernel, n_chunks=n_chunks, cs=cs)

    out = pl.pallas_call(
        kernel,
        out_shape=jax.ShapeDtypeStruct((1, b_pad), jnp.float32),
        grid_spec=pltpu.PrefetchScalarGridSpec(
            num_scalar_prefetch=0,
            grid=(g,),
            in_specs=[
                pl.BlockSpec((D, tb), lambda i: (0, i)),    # x^T: batch-tiled
                pl.BlockSpec((H1, D), const2),              # W1^T (resident)
                pl.BlockSpec((H1, 1), const2),              # b1^T
                pl.BlockSpec((H2, H1), const2),             # W2^T
                pl.BlockSpec((H2, 1), const2),              # b2^T
                pl.BlockSpec((H2, 1), const2),              # W3^T column
                pl.BlockSpec((1, 1), const2),               # b3
            ],
            out_specs=pl.BlockSpec((1, tb), lambda i: (0, i)),
        ),
        compiler_params=pltpu.CompilerParams(
            dimension_semantics=("parallel",),
        ),
        cost_estimate=pl.CostEstimate(
            flops=int(flops),
            transcendentals=int(transcendentals),
            bytes_accessed=bytes_accessed,
        ),
    )(xt, w1t, b1t, w2t, b2t, w3t, b3)

    # (1, b_pad) lane-major values -> (B, 1), dropping padded columns.
    return out.reshape(b_pad)[:B].reshape(B, 1)


def init_value_params(key, state_dim, hidden_size=(128, 128)):
    """Mimics nn.Linear default init (U(-1/sqrt(fan_in), +)); value_head
    weight scaled by 0.1 and bias zeroed, as in the PyTorch module."""
    params = {}
    dims = [state_dim] + list(hidden_size)
    keys = jax.random.split(key, 2 * len(hidden_size) + 1)
    ki = 0
    for i, (din, dout) in enumerate(zip(dims[:-1], dims[1:]), start=1):
        bound = 1.0 / math.sqrt(din)
        params[f"w{i}"] = jax.random.uniform(
            keys[ki], (din, dout), jnp.float32, -bound, bound)
        ki += 1
        params[f"b{i}"] = jax.random.uniform(
            keys[ki], (1, dout), jnp.float32, -bound, bound)
        ki += 1
    # value head: (1, last_dim) row layout (== PyTorch weight shape), *0.1, bias 0
    din = dims[-1]
    bound = 1.0 / math.sqrt(din)
    n = len(hidden_size) + 1
    params[f"w{n}"] = 0.1 * jax.random.uniform(
        keys[ki], (1, din), jnp.float32, -bound, bound)
    params[f"b{n}"] = jnp.zeros((1, 1), jnp.float32)
    return params


def value_forward_ref(x, params):
    """Pure-JAX reference for correctness checking."""
    h = jnp.tanh(x @ params["w1"] + params["b1"])
    h = jnp.tanh(h @ params["w2"] + params["b2"])
    return h @ params["w3"].T + params["b3"]


if __name__ == "__main__":
    key = jax.random.PRNGKey(0)
    k_param, k_x, k_x2 = jax.random.split(key, 3)

    batch, state_dim = 8, 16
    params = init_value_params(k_param, state_dim, hidden_size=(128, 128))
    x = jax.random.normal(k_x, (batch, state_dim), jnp.float32)
    ref = value_forward_ref(x, params)

    # Exact-path check (f32 MXU operands): tight tolerance.
    out_f32 = jax.block_until_ready(
        value_forward(x, params, mxu_dtype=jnp.float32))
    assert out_f32.shape == (batch, 1), out_f32.shape
    assert jnp.allclose(out_f32, ref, atol=1e-4, rtol=1e-4), (
        f"f32 mismatch: max abs err {jnp.max(jnp.abs(out_f32 - ref))}")

    # Default path (bf16 MXU operands, f32 accumulation): looser tolerance is
    # a test artifact of the reduced-precision matmul inputs, not a kernel bug.
    out = jax.block_until_ready(value_forward(x, params))
    assert out.shape == (batch, 1), out.shape
    assert jnp.allclose(out, ref, atol=1e-2, rtol=1e-2), (
        f"bf16 mismatch: max abs err {jnp.max(jnp.abs(out - ref))}")

    # Larger non-multiple batch: exercises multi-tile grid (>=2 steps for v7x
    # megacore), sub-chunked kernel body, and the padding/slice path.
    batch2 = 1000
    x2 = jax.random.normal(k_x2, (batch2, state_dim), jnp.float32)
    out2 = jax.block_until_ready(value_forward(x2, params))
    ref2 = value_forward_ref(x2, params)
    assert out2.shape == (batch2, 1), out2.shape
    assert jnp.allclose(out2, ref2, atol=1e-2, rtol=1e-2), (
        f"bf16 mismatch: max abs err {jnp.max(jnp.abs(out2 - ref2))}")

    print("KERNEL_OK")
</pallas_src>

<mosaic_0001>
module attributes {stable_mosaic.version = 11 : i64} {
  func.func @_value_kernel(%arg0: i32, %arg1: memref<16x128xf32, #tpu.memory_space<vmem>>, %arg2: memref<128x16xf32, #tpu.memory_space<vmem>>, %arg3: memref<128x1xf32, #tpu.memory_space<vmem>>, %arg4: memref<128x128xf32, #tpu.memory_space<vmem>>, %arg5: memref<128x1xf32, #tpu.memory_space<vmem>>, %arg6: memref<128x1xf32, #tpu.memory_space<vmem>>, %arg7: memref<1x1xf32, #tpu.memory_space<vmem>>, %arg8: memref<1x128xf32, #tpu.memory_space<vmem>>) attributes {dimension_semantics = [#tpu.dimension_semantics<parallel>], iteration_bounds = array<i64: 1>, scalar_prefetch = 0 : i64, scratch_operands = 0 : i64, tpu.core_type = #tpu.core_type<tc>, window_params = [{transform_indices = @transform_0, window_bounds = array<i64: 16, 128>}, {pipeline_mode = #tpu.pipeline_mode<synchronous>, transform_indices = @transform_1, window_bounds = array<i64: 128, 16>}, {pipeline_mode = #tpu.pipeline_mode<synchronous>, transform_indices = @transform_2, window_bounds = array<i64: 128, 1>}, {pipeline_mode = #tpu.pipeline_mode<synchronous>, transform_indices = @transform_3, window_bounds = array<i64: 128, 128>}, {pipeline_mode = #tpu.pipeline_mode<synchronous>, transform_indices = @transform_4, window_bounds = array<i64: 128, 1>}, {pipeline_mode = #tpu.pipeline_mode<synchronous>, transform_indices = @transform_5, window_bounds = array<i64: 128, 1>}, {pipeline_mode = #tpu.pipeline_mode<synchronous>, transform_indices = @transform_6, window_bounds = array<i64: 1, 1>}, {transform_indices = @transform_7, window_bounds = array<i64: 1, 128>}]} {
    %c0 = arith.constant 0 : index
    %c0_0 = arith.constant 0 : index
    %0 = vector.load %arg2[%c0, %c0_0] : memref<128x16xf32, #tpu.memory_space<vmem>>, vector<128x16xf32>
    %c0_1 = arith.constant 0 : index
    %c0_2 = arith.constant 0 : index
    %1 = vector.load %arg4[%c0_1, %c0_2] : memref<128x128xf32, #tpu.memory_space<vmem>>, vector<128x128xf32>
    %c0_3 = arith.constant 0 : index
    %c0_4 = arith.constant 0 : index
    %2 = vector.load %arg3[%c0_3, %c0_4] : memref<128x1xf32, #tpu.memory_space<vmem>>, vector<128x1xf32>
    %c0_5 = arith.constant 0 : index
    %c0_6 = arith.constant 0 : index
    %3 = vector.load %arg5[%c0_5, %c0_6] : memref<128x1xf32, #tpu.memory_space<vmem>>, vector<128x1xf32>
    %c0_7 = arith.constant 0 : index
    %c0_8 = arith.constant 0 : index
    %4 = vector.load %arg6[%c0_7, %c0_8] : memref<128x1xf32, #tpu.memory_space<vmem>>, vector<128x1xf32>
    %c0_9 = arith.constant 0 : index
    %c0_10 = arith.constant 0 : index
    %5 = vector.load %arg7[%c0_9, %c0_10] : memref<1x1xf32, #tpu.memory_space<vmem>>, vector<1x1xf32>
    %c0_11 = arith.constant 0 : index
    %c0_12 = arith.constant 0 : index
    %6 = vector.load %arg1[%c0_11, %c0_12] : memref<16x128xf32, #tpu.memory_space<vmem>>, vector<16x128xf32>
    %cst = arith.constant dense<0.000000e+00> : vector<128x128xf32>
    %7 = tpu.matmul %0, %6, %cst {dimension_numbers = #tpu.dot_dimension_numbers<[1], [0], [0], [1], [0, 0, 1, 1], [], []>} : vector<128x16xf32>, vector<16x128xf32>, vector<128x128xf32> -> vector<128x128xf32>
    %8 = vector.broadcast %2 : vector<128x1xf32> to vector<128x128xf32>
    %9 = arith.addf %7, %8 : vector<128x128xf32>
    %10 = math.tanh %9 : vector<128x128xf32>
    %cst_13 = arith.constant dense<0.000000e+00> : vector<128x128xf32>
    %11 = tpu.matmul %1, %10, %cst_13 {dimension_numbers = #tpu.dot_dimension_numbers<[1], [0], [0], [1], [0, 0, 1, 1], [], []>} : vector<128x128xf32>, vector<128x128xf32>, vector<128x128xf32> -> vector<128x128xf32>
    %12 = vector.broadcast %3 : vector<128x1xf32> to vector<128x128xf32>
    %13 = arith.addf %11, %12 : vector<128x128xf32>
    %14 = math.tanh %13 : vector<128x128xf32>
    %15 = vector.broadcast %4 : vector<128x1xf32> to vector<128x128xf32>
    %16 = arith.mulf %14, %15 : vector<128x128xf32>
    %cst_14 = arith.constant dense<0.000000e+00> : vector<128xf32>
    %17 = vector.multi_reduction <add>, %16, %cst_14 [0] : vector<128x128xf32> to vector<128xf32>
    %18 = vector.shape_cast %17 : vector<128xf32> to vector<1x128xf32>
    %19 = vector.broadcast %5 : vector<1x1xf32> to vector<1x128xf32>
    %20 = arith.addf %18, %19 : vector<1x128xf32>
    %c0_15 = arith.constant 0 : index
    %c0_16 = arith.constant 0 : index
    %21 = vector.load %arg8[%c0_15, %c0_16] : memref<1x128xf32, #tpu.memory_space<vmem>>, vector<1x128xf32>
    tpu.vector_store %arg8[%c0_15, %c0_16], %20 {strides = array<i32>} : memref<1x128xf32, #tpu.memory_space<vmem>>, vector<1x128xf32>,
    return
  }
  func.func @transform_0(%arg0: i32) -> (i32, i32) {
    %c0_i32 = arith.constant 0 : i32
    %c0_i32_0 = arith.constant 0 : i32
    return %c0_i32, %arg0 : i32, i32
  }
  func.func @transform_1(%arg0: i32) -> (i32, i32) {
    %c0_i32 = arith.constant 0 : i32
    %c0_i32_0 = arith.constant 0 : i32
    %c0_i32_1 = arith.constant 0 : i32
    return %c0_i32, %c0_i32_0 : i32, i32
  }
  func.func @transform_2(%arg0: i32) -> (i32, i32) {
    %c0_i32 = arith.constant 0 : i32
    %c0_i32_0 = arith.constant 0 : i32
    %c0_i32_1 = arith.constant 0 : i32
    return %c0_i32, %c0_i32_0 : i32, i32
  }
  func.func @transform_3(%arg0: i32) -> (i32, i32) {
    %c0_i32 = arith.constant 0 : i32
    %c0_i32_0 = arith.constant 0 : i32
    %c0_i32_1 = arith.constant 0 : i32
    return %c0_i32, %c0_i32_0 : i32, i32
  }
  func.func @transform_4(%arg0: i32) -> (i32, i32) {
    %c0_i32 = arith.constant 0 : i32
    %c0_i32_0 = arith.constant 0 : i32
    %c0_i32_1 = arith.constant 0 : i32
    return %c0_i32, %c0_i32_0 : i32, i32
  }
  func.func @transform_5(%arg0: i32) -> (i32, i32) {
    %c0_i32 = arith.constant 0 : i32
    %c0_i32_0 = arith.constant 0 : i32
    %c0_i32_1 = arith.constant 0 : i32
    return %c0_i32, %c0_i32_0 : i32, i32
  }
  func.func @transform_6(%arg0: i32) -> (i32, i32) {
    %c0_i32 = arith.constant 0 : i32
    %c0_i32_0 = arith.constant 0 : i32
    %c0_i32_1 = arith.constant 0 : i32
    return %c0_i32, %c0_i32_0 : i32, i32
  }
  func.func @transform_7(%arg0: i32) -> (i32, i32) {
    %c0_i32 = arith.constant 0 : i32
    %c0_i32_0 = arith.constant 0 : i32
    return %c0_i32, %arg0 : i32, i32
  }
}

</mosaic_0001>

<llo_original>
// kernel: tpu_custom_call.1
$region0: #{tpu_custom_call.1}
  #allocation0 [shape = 'u32[]', space=smem, size = 0x4, offset = 0x4, fixed_abs, tag = 'smem constant byte address 0x4 - core index']
  #allocation1 [shape = 'u32[72,128]{1,0:T(1,128)}', space=vmem, size = 0x9000, scoped, tag = 'internal scratch']
  #allocation2 [shape = 'f32[1,1]{1,0:T(1,128)S(1)}', space=vmem, size = 0x200, scoped, tag = 'scoped memory for tpu_custom_call.1']
  %s0 = inlined_call_operand.vmem [shape: f32[16,128], index: 0, kind: input, shape index: {}]
  %s1 = inlined_call_operand.vmem [shape: f32[128,16], index: 1, kind: input, shape index: {}]
  %s2 = inlined_call_operand.vmem [shape: f32[128,1], index: 2, kind: input, shape index: {}]
  %s3 = inlined_call_operand.vmem [shape: f32[128,128], index: 3, kind: input, shape index: {}]
  %s4 = inlined_call_operand.vmem [shape: f32[128,1], index: 4, kind: input, shape index: {}]
  %s5 = inlined_call_operand.vmem [shape: f32[128,1], index: 5, kind: input, shape index: {}]
  %s6 = inlined_call_operand.<no memory space> [shape: f32[1,1], index: 6, kind: input, shape index: {}]
  %s7 = inlined_call_operand.hbm [shape: f32[1,128], index: 7, kind: output, shape index: {}]
  %s8 = sld [smem:[#allocation0]]
  $region38: #{tpu_custom_call.1} parent=0
    _
  %s10 = ssub.s32 1, %s8
  %s11 = scalar_select 0, %s10, %s8
  %v12 = vstv %s6
  %13 = vst [vmem:[#allocation2] sm:$0x1] %v12
  $region1: #{tpu_custom_call.1} parent=0
    #allocation3 [shape = 'u8[512]{0}', space=vmem, size = 0x400, scoped, tag = 'output window, operand 0, single buffered']
    #allocation4 [shape = 's32[1]{0}', space=sflag, size = 0x4, scoped, tag = 'scoped memory for tpu_custom_call.1']
    %14 = vsyncpa [#allocation4], 0
    // Predicated region
    $region2: #{tpu_custom_call.1} parent=1 // pred_check
      _
    $region3: #{tpu_custom_call.1} parent=1 // pred_check_branch
      %16 = sbr.rel (0) target = $region5
    $region4: #{tpu_custom_call.1} parent=1 // pred_region
      _
    $region5: #{tpu_custom_call.1} parent=1 // pred_fallthru
      _
    // Predicated region
    $region6: #{tpu_custom_call.1} parent=1 // pred_check
      _
    $region7: #{tpu_custom_call.1} parent=1 // pred_check_branch
      %18 = sbr.rel (0) target = $region9
    $region8: #{tpu_custom_call.1} parent=1 // pred_region
      _
    $region9: #{tpu_custom_call.1} parent=1 // pred_fallthru
      _
    // Predicated region
    $region10: #{tpu_custom_call.1} parent=1 // pred_check
      _
    $region11: #{tpu_custom_call.1} parent=1 // pred_check_branch
      %20 = sbr.rel (0) target = $region13
    $region12: #{tpu_custom_call.1} parent=1 // pred_region
      _
    $region13: #{tpu_custom_call.1} parent=1 // pred_fallthru
      _
    // Predicated region
    $region14: #{tpu_custom_call.1} parent=1 // pred_check
      _
    $region15: #{tpu_custom_call.1} parent=1 // pred_check_branch
      %22 = sbr.rel (0) target = $region17
    $region16: #{tpu_custom_call.1} parent=1 // pred_region
      _
    $region17: #{tpu_custom_call.1} parent=1 // pred_fallthru
      _
    // Predicated region
    $region18: #{tpu_custom_call.1} parent=1 // pred_check
      _
    $region19: #{tpu_custom_call.1} parent=1 // pred_check_branch
      %24 = sbr.rel (0) target = $region21
    $region20: #{tpu_custom_call.1} parent=1 // pred_region
      _
    $region21: #{tpu_custom_call.1} parent=1 // pred_fallthru
      _
    // Predicated region
    $region22: #{tpu_custom_call.1} parent=1 // pred_check
      _
    $region23: #{tpu_custom_call.1} parent=1 // pred_check_branch
      %26 = sbr.rel (0) target = $region25
    $region24: #{tpu_custom_call.1} parent=1 // pred_region
      _
    $region25: #{tpu_custom_call.1} parent=1 // pred_fallthru
      _
    // Predicated region
    $region26: #{tpu_custom_call.1} parent=1 // pred_check
      _
    $region27: #{tpu_custom_call.1} parent=1 // pred_check_branch
      %28 = sbr.rel (0) target = $region29
    $region28: #{tpu_custom_call.1} parent=1 // pred_region
      _
    $region29: #{tpu_custom_call.1} parent=1 // pred_fallthru
      _
    %v29 = vld [vmem:[%s1] sm:$0xff]
    %v30 = vld [vmem:[%s1 + $0x8] sm:$0xff]
    %v31 = vld [vmem:[%s1 + $0x10] sm:$0xff]
    %v32 = vld [vmem:[%s1 + $0x18] sm:$0xff]
    %v33 = vld [vmem:[%s1 + $0x20] sm:$0xff]
    %v34 = vld [vmem:[%s1 + $0x28] sm:$0xff]
    %v35 = vld [vmem:[%s1 + $0x30] sm:$0xff]
    %v36 = vld [vmem:[%s1 + $0x38] sm:$0xff]
    %v37 = vld [vmem:[%s1 + $0x40] sm:$0xff]
    %v38 = vld [vmem:[%s1 + $0x48] sm:$0xff]
    %v39 = vld [vmem:[%s1 + $0x50] sm:$0xff]
    %v40 = vld [vmem:[%s1 + $0x58] sm:$0xff]
    %v41 = vld [vmem:[%s1 + $0x60] sm:$0xff]
    %v42 = vld [vmem:[%s1 + $0x68] sm:$0xff]
    %v43 = vld [vmem:[%s1 + $0x70] sm:$0xff]
    %v44 = vld [vmem:[%s1 + $0x78] sm:$0xff]
    %v45 = vld [vmem:[%s3] sm:$0xff]
    %v46 = vld [vmem:[%s3 + $0x8] sm:$0xff]
    %v47 = vld [vmem:[%s3 + $0x10] sm:$0xff]
    %v48 = vld [vmem:[%s3 + $0x18] sm:$0xff]
    %v49 = vld [vmem:[%s3 + $0x20] sm:$0xff]
    %v50 = vld [vmem:[%s3 + $0x28] sm:$0xff]
    %v51 = vld [vmem:[%s3 + $0x30] sm:$0xff]
    %v52 = vld [vmem:[%s3 + $0x38] sm:$0xff]
    %v53 = vld [vmem:[%s3 + $0x40] sm:$0xff]
    %v54 = vld [vmem:[%s3 + $0x48] sm:$0xff]
    %v55 = vld [vmem:[%s3 + $0x50] sm:$0xff]
    %v56 = vld [vmem:[%s3 + $0x58] sm:$0xff]
    %v57 = vld [vmem:[%s3 + $0x60] sm:$0xff]
    %v58 = vld [vmem:[%s3 + $0x68] sm:$0xff]
    %v59 = vld [vmem:[%s3 + $0x70] sm:$0xff]
    %v60 = vld [vmem:[%s3 + $0x78] sm:$0xff]
    %v61 = vld [vmem:[%s2] sm:$0xff]
    %v62 = vld [vmem:[%s2 + $0x8] sm:$0xff]
    %v63 = vld [vmem:[%s2 + $0x10] sm:$0xff]
    %v64 = vld [vmem:[%s2 + $0x18] sm:$0xff]
    %v65 = vld [vmem:[%s2 + $0x20] sm:$0xff]
    %v66 = vld [vmem:[%s2 + $0x28] sm:$0xff]
    %v67 = vld [vmem:[%s2 + $0x30] sm:$0xff]
    %v68 = vld [vmem:[%s2 + $0x38] sm:$0xff]
    %v69 = vld [vmem:[%s2 + $0x40] sm:$0xff]
    %v70 = vld [vmem:[%s2 + $0x48] sm:$0xff]
    %v71 = vld [vmem:[%s2 + $0x50] sm:$0xff]
    %v72 = vld [vmem:[%s2 + $0x58] sm:$0xff]
    %v73 = vld [vmem:[%s2 + $0x60] sm:$0xff]
    %v74 = vld [vmem:[%s2 + $0x68] sm:$0xff]
    %v75 = vld [vmem:[%s2 + $0x70] sm:$0xff]
    %v76 = vld [vmem:[%s2 + $0x78] sm:$0xff]
    %v77 = vld [vmem:[%s4] sm:$0xff]
    %v78 = vld [vmem:[%s4 + $0x8] sm:$0xff]
    %v79 = vld [vmem:[%s4 + $0x10] sm:$0xff]
    %v80 = vld [vmem:[%s4 + $0x18] sm:$0xff]
    %v81 = vld [vmem:[%s4 + $0x20] sm:$0xff]
    %v82 = vld [vmem:[%s4 + $0x28] sm:$0xff]
    %v83 = vld [vmem:[%s4 + $0x30] sm:$0xff]
    %v84 = vld [vmem:[%s4 + $0x38] sm:$0xff]
    %v85 = vld [vmem:[%s4 + $0x40] sm:$0xff]
    %v86 = vld [vmem:[%s4 + $0x48] sm:$0xff]
    %v87 = vld [vmem:[%s4 + $0x50] sm:$0xff]
    %v88 = vld [vmem:[%s4 + $0x58] sm:$0xff]
    %v89 = vld [vmem:[%s4 + $0x60] sm:$0xff]
    %v90 = vld [vmem:[%s4 + $0x68] sm:$0xff]
    %v91 = vld [vmem:[%s4 + $0x70] sm:$0xff]
    %v92 = vld [vmem:[%s4 + $0x78] sm:$0xff]
    %v93 = vld [vmem:[%s5] sm:$0xff]
    %v94 = vld [vmem:[%s5 + $0x8] sm:$0xff]
    %v95 = vld [vmem:[%s5 + $0x10] sm:$0xff]
    %v96 = vld [vmem:[%s5 + $0x18] sm:$0xff]
    %v97 = vld [vmem:[%s5 + $0x20] sm:$0xff]
    %v98 = vld [vmem:[%s5 + $0x28] sm:$0xff]
    %v99 = vld [vmem:[%s5 + $0x30] sm:$0xff]
    %v100 = vld [vmem:[%s5 + $0x38] sm:$0xff]
    %v101 = vld [vmem:[%s5 + $0x40] sm:$0xff]
    %v102 = vld [vmem:[%s5 + $0x48] sm:$0xff]
    %v103 = vld [vmem:[%s5 + $0x50] sm:$0xff]
    %v104 = vld [vmem:[%s5 + $0x58] sm:$0xff]
    %v105 = vld [vmem:[%s5 + $0x60] sm:$0xff]
    %v106 = vld [vmem:[%s5 + $0x68] sm:$0xff]
    %v107 = vld [vmem:[%s5 + $0x70] sm:$0xff]
    %v108 = vld [vmem:[%s5 + $0x78] sm:$0xff]
    %v109 = vld [vmem:[#allocation2] sm:$0x1]
    %v110 = vld [vmem:[%s0] sm:$0xff]
    %v111 = vld [vmem:[%s0 + $0x8] sm:$0xff]
    %113 = vset.pattern.permute.xlu0 0
    %114 = vperm.xlu0 %113, %v61
    %v115 = vpop.permute.xlu0 %114
    %118 = vset.pattern.permute.xlu0 0
    %119 = vperm.xlu0 %118, %v62
    %v120 = vpop.permute.xlu0 %119
    %123 = vset.pattern.permute.xlu0 0
    %124 = vperm.xlu0 %123, %v63
    %v125 = vpop.permute.xlu0 %124
    %128 = vset.pattern.permute.xlu0 0
    %129 = vperm.xlu0 %128, %v64
    %v130 = vpop.permute.xlu0 %129
    %133 = vset.pattern.permute.xlu0 0
    %134 = vperm.xlu0 %133, %v65
    %v135 = vpop.permute.xlu0 %134
    %138 = vset.pattern.permute.xlu0 0
    %139 = vperm.xlu0 %138, %v66
    %v140 = vpop.permute.xlu0 %139
    %143 = vset.pattern.permute.xlu0 0
    %144 = vperm.xlu0 %143, %v67
    %v145 = vpop.permute.xlu0 %144
    %148 = vset.pattern.permute.xlu0 0
    %149 = vperm.xlu0 %148, %v68
    %v150 = vpop.permute.xlu0 %149
    %153 = vset.pattern.permute.xlu0 0
    %154 = vperm.xlu0 %153, %v69
    %v155 = vpop.permute.xlu0 %154
    %158 = vset.pattern.permute.xlu0 0
    %159 = vperm.xlu0 %158, %v70
    %v160 = vpop.permute.xlu0 %159
    %163 = vset.pattern.permute.xlu0 0
    %164 = vperm.xlu0 %163, %v71
    %v165 = vpop.permute.xlu0 %164
    %168 = vset.pattern.permute.xlu0 0
    %169 = vperm.xlu0 %168, %v72
    %v170 = vpop.permute.xlu0 %169
    %173 = vset.pattern.permute.xlu0 0
    %174 = vperm.xlu0 %173, %v73
    %v175 = vpop.permute.xlu0 %174
    %178 = vset.pattern.permute.xlu0 0
    %179 = vperm.xlu0 %178, %v74
    %v180 = vpop.permute.xlu0 %179
    %183 = vset.pattern.permute.xlu0 0
    %184 = vperm.xlu0 %183, %v75
    %v185 = vpop.permute.xlu0 %184
    %188 = vset.pattern.permute.xlu0 0
    %189 = vperm.xlu0 %188, %v76
    %v190 = vpop.permute.xlu0 %189
    %vm192 = vcmask 130048
    %v194 = vsel %vm192, %v29, 0
    %v197 = vsel %vm192, %v30, 0
    %v200 = vsel %vm192, %v31, 0
    %v203 = vsel %vm192, %v32, 0
    %v206 = vsel %vm192, %v33, 0
    %v209 = vsel %vm192, %v34, 0
    %v212 = vsel %vm192, %v35, 0
    %v215 = vsel %vm192, %v36, 0
    %v218 = vsel %vm192, %v37, 0
    %v221 = vsel %vm192, %v38, 0
    %v224 = vsel %vm192, %v39, 0
    %v227 = vsel %vm192, %v40, 0
    %v230 = vsel %vm192, %v41, 0
    %v233 = vsel %vm192, %v42, 0
    %v236 = vsel %vm192, %v43, 0
    %v239 = vsel %vm192, %v44, 0
    %241 = vmatpush.msra.mxu0 0.0
    %242 = vmatpush.msra.mxu0 0.0
    %243 = vmatpush.msra.mxu0 0.0
    %244 = vmatpush.msra.mxu0 0.0
    %245 = vmatpush.msra.mxu0 0.0
    %246 = vmatpush.msra.mxu0 0.0
    %247 = vmatpush.msra.mxu0 0.0
    %248 = vmatpush.msra.mxu0 0.0
    %249 = vmatpush.msra.mxu0 0.0
    %250 = vmatpush.msra.mxu0 0.0
    %251 = vmatpush.msra.mxu0 0.0
    %252 = vmatpush.msra.mxu0 0.0
    %253 = vmatpush.msra.mxu0 0.0
    %254 = vmatpush.msra.mxu0 0.0
    %255 = vmatpush.msra.mxu0 %v111
    %256 = vmatpush.msra.mxu0 %v110
    %257 = vmatmul.f32.gmra.mxu0 %v194
    %v258 = vpop.f32.mrf.mxu0
    %v259 = vadd.f32 %v115, %v258
    %260 = vmatmul.f32.gmra.mxu0 %v197
    %v261 = vpop.f32.mrf.mxu0
    %v262 = vadd.f32 %v120, %v261
    %263 = vmatmul.f32.gmra.mxu0 %v200
    %v264 = vpop.f32.mrf.mxu0
    %v265 = vadd.f32 %v125, %v264
    %266 = vmatmul.f32.gmra.mxu0 %v203
    %v267 = vpop.f32.mrf.mxu0
    %v268 = vadd.f32 %v130, %v267
    %269 = vmatmul.f32.gmra.mxu0 %v206
    %v270 = vpop.f32.mrf.mxu0
    %v271 = vadd.f32 %v135, %v270
    %272 = vmatmul.f32.gmra.mxu0 %v209
    %v273 = vpop.f32.mrf.mxu0
    %v274 = vadd.f32 %v140, %v273
    %275 = vmatmul.f32.gmra.mxu0 %v212
    %v276 = vpop.f32.mrf.mxu0
    %v277 = vadd.f32 %v145, %v276
    %278 = vmatmul.f32.gmra.mxu0 %v215
    %v279 = vpop.f32.mrf.mxu0
    %v280 = vadd.f32 %v150, %v279
    %281 = vmatmul.f32.gmra.mxu0 %v218
    %v282 = vpop.f32.mrf.mxu0
    %v283 = vadd.f32 %v155, %v282
    %284 = vmatmul.f32.gmra.mxu0 %v221
    %v285 = vpop.f32.mrf.mxu0
    %v286 = vadd.f32 %v160, %v285
    %287 = vmatmul.f32.gmra.mxu0 %v224
    %v288 = vpop.f32.mrf.mxu0
    %v289 = vadd.f32 %v165, %v288
    %290 = vmatmul.f32.gmra.mxu0 %v227
    %v291 = vpop.f32.mrf.mxu0
    %v292 = vadd.f32 %v170, %v291
    %293 = vmatmul.f32.gmra.mxu0 %v230
    %v294 = vpop.f32.mrf.mxu0
    %v295 = vadd.f32 %v175, %v294
    %296 = vmatmul.f32.gmra.mxu0 %v233
    %v297 = vpop.f32.mrf.mxu0
    %v298 = vadd.f32 %v180, %v297
    %299 = vmatmul.f32.gmra.mxu0 %v236
    %v300 = vpop.f32.mrf.mxu0
    %v301 = vadd.f32 %v185, %v300
    %302 = vmatmul.f32.gmra.mxu0 %v239
    %v303 = vpop.f32.mrf.mxu0
    %v304 = vadd.f32 %v190, %v303
    %305 = vdwg.mxu0
    %v306 = vtanh.pop %v259
    %v307 = vtanh.pop %v262
    %v308 = vtanh.pop %v265
    %v309 = vtanh.pop %v268
    %v310 = vtanh.pop %v271
    %v311 = vtanh.pop %v274
    %v312 = vtanh.pop %v277
    %v313 = vtanh.pop %v280
    %v314 = vtanh.pop %v283
    %v315 = vtanh.pop %v286
    %v316 = vtanh.pop %v289
    %v317 = vtanh.pop %v292
    %v318 = vtanh.pop %v295
    %v319 = vtanh.pop %v298
    %v320 = vtanh.pop %v301
    %v321 = vtanh.pop %v304
    %323 = vset.pattern.permute.xlu0 0
    %324 = vperm.xlu0 %323, %v77
    %v325 = vpop.permute.xlu0 %324
    %328 = vset.pattern.permute.xlu0 0
    %329 = vperm.xlu0 %328, %v78
    %v330 = vpop.permute.xlu0 %329
    %333 = vset.pattern.permute.xlu0 0
    %334 = vperm.xlu0 %333, %v79
    %v335 = vpop.permute.xlu0 %334
    %338 = vset.pattern.permute.xlu0 0
    %339 = vperm.xlu0 %338, %v80
    %v340 = vpop.permute.xlu0 %339
    %343 = vset.pattern.permute.xlu0 0
    %344 = vperm.xlu0 %343, %v81
    %v345 = vpop.permute.xlu0 %344
    %348 = vset.pattern.permute.xlu0 0
    %349 = vperm.xlu0 %348, %v82
    %v350 = vpop.permute.xlu0 %349
    %353 = vset.pattern.permute.xlu0 0
    %354 = vperm.xlu0 %353, %v83
    %v355 = vpop.permute.xlu0 %354
    %358 = vset.pattern.permute.xlu0 0
    %359 = vperm.xlu0 %358, %v84
    %v360 = vpop.permute.xlu0 %359
    %363 = vset.pattern.permute.xlu0 0
    %364 = vperm.xlu0 %363, %v85
    %v365 = vpop.permute.xlu0 %364
    %368 = vset.pattern.permute.xlu0 0
    %369 = vperm.xlu0 %368, %v86
    %v370 = vpop.permute.xlu0 %369
    %373 = vset.pattern.permute.xlu0 0
    %374 = vperm.xlu0 %373, %v87
    %v375 = vpop.permute.xlu0 %374
    %378 = vset.pattern.permute.xlu0 0
    %379 = vperm.xlu0 %378, %v88
    %v380 = vpop.permute.xlu0 %379
    %383 = vset.pattern.permute.xlu0 0
    %384 = vperm.xlu0 %383, %v89
    %v385 = vpop.permute.xlu0 %384
    %388 = vset.pattern.permute.xlu0 0
    %389 = vperm.xlu0 %388, %v90
    %v390 = vpop.permute.xlu0 %389
    %393 = vset.pattern.permute.xlu0 0
    %394 = vperm.xlu0 %393, %v91
    %v395 = vpop.permute.xlu0 %394
    %398 = vset.pattern.permute.xlu0 0
    %399 = vperm.xlu0 %398, %v92
    %v400 = vpop.permute.xlu0 %399
    %402 = vmatpush.msra.mxu0 %v321
    %403 = vmatpush.msra.mxu0 %v320
    %404 = vmatpush.msra.mxu0 %v319
    %405 = vmatpush.msra.mxu0 %v318
    %406 = vmatpush.msra.mxu0 %v317
    %407 = vmatpush.msra.mxu0 %v316
    %408 = vmatpush.msra.mxu0 %v315
    %409 = vmatpush.msra.mxu0 %v314
    %410 = vmatpush.msra.mxu0 %v313
    %411 = vmatpush.msra.mxu0 %v312
    %412 = vmatpush.msra.mxu0 %v311
    %413 = vmatpush.msra.mxu0 %v310
    %414 = vmatpush.msra.mxu0 %v309
    %415 = vmatpush.msra.mxu0 %v308
    %416 = vmatpush.msra.mxu0 %v307
    %417 = vmatpush.msra.mxu0 %v306
    %418 = vmatmul.f32.gmra.mxu0 %v45
    %v419 = vpop.f32.mrf.mxu0
    %v420 = vadd.f32 %v325, %v419
    %421 = vmatmul.f32.gmra.mxu0 %v46
    %v422 = vpop.f32.mrf.mxu0
    %v423 = vadd.f32 %v330, %v422
    %424 = vmatmul.f32.gmra.mxu0 %v47
    %v425 = vpop.f32.mrf.mxu0
    %v426 = vadd.f32 %v335, %v425
    %427 = vmatmul.f32.gmra.mxu0 %v48
    %v428 = vpop.f32.mrf.mxu0
    %v429 = vadd.f32 %v340, %v428
    %430 = vmatmul.f32.gmra.mxu0 %v49
    %v431 = vpop.f32.mrf.mxu0
    %v432 = vadd.f32 %v345, %v431
    %433 = vmatmul.f32.gmra.mxu0 %v50
    %v434 = vpop.f32.mrf.mxu0
    %v435 = vadd.f32 %v350, %v434
    %436 = vmatmul.f32.gmra.mxu0 %v51
    %v437 = vpop.f32.mrf.mxu0
    %v438 = vadd.f32 %v355, %v437
    %439 = vmatmul.f32.gmra.mxu0 %v52
    %v440 = vpop.f32.mrf.mxu0
    %v441 = vadd.f32 %v360, %v440
    %442 = vmatmul.f32.gmra.mxu0 %v53
    %v443 = vpop.f32.mrf.mxu0
    %v444 = vadd.f32 %v365, %v443
    %445 = vmatmul.f32.gmra.mxu0 %v54
    %v446 = vpop.f32.mrf.mxu0
    %v447 = vadd.f32 %v370, %v446
    %448 = vmatmul.f32.gmra.mxu0 %v55
    %v449 = vpop.f32.mrf.mxu0
    %v450 = vadd.f32 %v375, %v449
    %451 = vmatmul.f32.gmra.mxu0 %v56
    %v452 = vpop.f32.mrf.mxu0
    %v453 = vadd.f32 %v380, %v452
    %454 = vmatmul.f32.gmra.mxu0 %v57
    %v455 = vpop.f32.mrf.mxu0
    %v456 = vadd.f32 %v385, %v455
    %457 = vmatmul.f32.gmra.mxu0 %v58
    %v458 = vpop.f32.mrf.mxu0
    %v459 = vadd.f32 %v390, %v458
    %460 = vmatmul.f32.gmra.mxu0 %v59
    %v461 = vpop.f32.mrf.mxu0
    %v462 = vadd.f32 %v395, %v461
    %463 = vmatmul.f32.gmra.mxu0 %v60
    %v464 = vpop.f32.mrf.mxu0
    %v465 = vadd.f32 %v400, %v464
    %466 = vdwg.mxu0
    %v467 = vtanh.pop %v420
    %v468 = vtanh.pop %v423
    %v469 = vtanh.pop %v426
    %v470 = vtanh.pop %v429
    %v471 = vtanh.pop %v432
    %v472 = vtanh.pop %v435
    %v473 = vtanh.pop %v438
    %v474 = vtanh.pop %v441
    %v475 = vtanh.pop %v444
    %v476 = vtanh.pop %v447
    %v477 = vtanh.pop %v450
    %v478 = vtanh.pop %v453
    %v479 = vtanh.pop %v456
    %v480 = vtanh.pop %v459
    %v481 = vtanh.pop %v462
    %v482 = vtanh.pop %v465
    %484 = vset.pattern.permute.xlu0 0
    %485 = vperm.xlu0 %484, %v93
    %v486 = vpop.permute.xlu0 %485
    %489 = vset.pattern.permute.xlu0 0
    %490 = vperm.xlu0 %489, %v94
    %v491 = vpop.permute.xlu0 %490
    %494 = vset.pattern.permute.xlu0 0
    %495 = vperm.xlu0 %494, %v95
    %v496 = vpop.permute.xlu0 %495
    %499 = vset.pattern.permute.xlu0 0
    %500 = vperm.xlu0 %499, %v96
    %v501 = vpop.permute.xlu0 %500
    %504 = vset.pattern.permute.xlu0 0
    %505 = vperm.xlu0 %504, %v97
    %v506 = vpop.permute.xlu0 %505
    %509 = vset.pattern.permute.xlu0 0
    %510 = vperm.xlu0 %509, %v98
    %v511 = vpop.permute.xlu0 %510
    %514 = vset.pattern.permute.xlu0 0
    %515 = vperm.xlu0 %514, %v99
    %v516 = vpop.permute.xlu0 %515
    %519 = vset.pattern.permute.xlu0 0
    %520 = vperm.xlu0 %519, %v100
    %v521 = vpop.permute.xlu0 %520
    %524 = vset.pattern.permute.xlu0 0
    %525 = vperm.xlu0 %524, %v101
    %v526 = vpop.permute.xlu0 %525
    %529 = vset.pattern.permute.xlu0 0
    %530 = vperm.xlu0 %529, %v102
    %v531 = vpop.permute.xlu0 %530
    %534 = vset.pattern.permute.xlu0 0
    %535 = vperm.xlu0 %534, %v103
    %v536 = vpop.permute.xlu0 %535
    %539 = vset.pattern.permute.xlu0 0
    %540 = vperm.xlu0 %539, %v104
    %v541 = vpop.permute.xlu0 %540
    %544 = vset.pattern.permute.xlu0 0
    %545 = vperm.xlu0 %544, %v105
    %v546 = vpop.permute.xlu0 %545
    %549 = vset.pattern.permute.xlu0 0
    %550 = vperm.xlu0 %549, %v106
    %v551 = vpop.permute.xlu0 %550
    %554 = vset.pattern.permute.xlu0 0
    %555 = vperm.xlu0 %554, %v107
    %v556 = vpop.permute.xlu0 %555
    %559 = vset.pattern.permute.xlu0 0
    %560 = vperm.xlu0 %559, %v108
    %v561 = vpop.permute.xlu0 %560
    %v563 = vmul.f32 %v467, %v486
    %v564 = vmul.f32 %v468, %v491
    %v565 = vmul.f32 %v469, %v496
    %v566 = vmul.f32 %v470, %v501
    %v567 = vmul.f32 %v471, %v506
    %v568 = vmul.f32 %v472, %v511
    %v569 = vmul.f32 %v473, %v516
    %v570 = vmul.f32 %v474, %v521
    %v571 = vmul.f32 %v475, %v526
    %v572 = vmul.f32 %v476, %v531
    %v573 = vmul.f32 %v477, %v536
    %v574 = vmul.f32 %v478, %v541
    %v575 = vmul.f32 %v479, %v546
    %v576 = vmul.f32 %v480, %v551
    %v577 = vmul.f32 %v481, %v556
    %v578 = vmul.f32 %v482, %v561
    %v579 = vadd.f32 %v563, %v564
    %v580 = vadd.f32 %v579, %v565
    %v581 = vadd.f32 %v580, %v566
    %v582 = vadd.f32 %v581, %v567
    %v583 = vadd.f32 %v582, %v568
    %v584 = vadd.f32 %v583, %v569
    %v585 = vadd.f32 %v584, %v570
    %v586 = vadd.f32 %v585, %v571
    %v587 = vadd.f32 %v586, %v572
    %v588 = vadd.f32 %v587, %v573
    %v589 = vadd.f32 %v588, %v574
    %v590 = vadd.f32 %v589, %v575
    %v591 = vadd.f32 %v590, %v576
    %v592 = vadd.f32 %v591, %v577
    %v593 = vadd.f32 %v592, %v578
    %v594 = vrot.slane %v593, 4
    %v595 = vadd.f32 %v593, %v594
    %v596 = vrot.slane %v595, 2
    %v597 = vadd.f32 %v595, %v596
    %v598 = vrot.slane %v597, 1
    %v599 = vadd.f32 %v597, %v598
    %601 = vset.pattern.permute.xlu0 0
    %602 = vperm.xlu0 %601, %v109
    %v603 = vpop.permute.xlu0 %602
    %v605 = vperm.slane %v603, 0
    %v606 = vadd.f32 %v599, %v605
    %607 = vst [vmem:[#allocation3] sm:$0x1] %v606
    // Predicated region
    $region30: #{tpu_custom_call.1} parent=1 // pred_check
      _
    $region31: #{tpu_custom_call.1} parent=1 // pred_check_branch
      %609 = sbr.rel (0) target = $region33
    $region32: #{tpu_custom_call.1} parent=1 // pred_region
      %611 = vsyncadd [#allocation4], 0
      %s613 = sshll.u32 [#allocation3], 4
      %s614 = int_to_ptr.vmem [resolvable:$true] %s613
      %s615 = sshll.u32 %s7, 4
      %s616 = int_to_ptr.hbm [resolvable:$true] %s615
      %618 = dma.vmem_to_hbm [thread:$0]  %s614, 16, %s616, [#allocation4]
    $region33: #{tpu_custom_call.1} parent=1 // pred_fallthru
      _
    // Predicated region
    $region34: #{tpu_custom_call.1} parent=1 // pred_check
      _
    $region35: #{tpu_custom_call.1} parent=1 // pred_check_branch
      %620 = sbr.rel (0) target = $region37
    $region36: #{tpu_custom_call.1} parent=1 // pred_region
      %622 = dma.done [#allocation4], 16
    $region37: #{tpu_custom_call.1} parent=1 // pred_fallthru
      _
    %623 = vsyncpa [#allocation4], 1

</llo_original>
